<compile_context>
chip_gen: v6e
topology: v6e:2x2x1
jax: 0.10.0
libtpu: 0.0.40
codegen_flags: <defaults>
</compile_context>

<pallas_src>
import functools

import jax
import jax.numpy as jnp
from jax.experimental import pallas as pl
from jax.experimental.pallas import tpu as pltpu

_LANES = 128
_MIB = 1024 * 1024
_MAX_ROW_TILE = 2048            # absolute ceiling; budget usually binds first
_WEIGHT_SINGLE_BUF_BYTES = 8 * _MIB   # single-buffer weights above this


# --------------------------------------------------------------------------
# Kernel body: fused Linear -> ReLU -> Linear on one (tn, d) tile of one level.
# --------------------------------------------------------------------------
def _proj_mlp_kernel(x_ref, w1_ref, b1_ref, w2_ref, b2_ref, o_ref):
    x = x_ref[...]                                                   # [tn, d]
    h = jnp.dot(x, w1_ref[...], preferred_element_type=jnp.float32)  # [tn, dp]
    h = jnp.maximum(h + b1_ref[...], 0.0)                            # f32 bias+ReLU
    # Cast only at the MXU input; accumulation stays f32.
    y = jnp.dot(h.astype(x.dtype), w2_ref[...],
                preferred_element_type=jnp.float32)                   # [tn, d]
    o_ref[...] = (y + b2_ref[...]).astype(o_ref.dtype)


# --------------------------------------------------------------------------
# Hardware / tiling helpers.
# --------------------------------------------------------------------------
def _sublanes_for(dtype):
    # (8,128) min tile for 4-byte, (16,128) for 2-byte, (32,128) for 1-byte.
    return max(8, 32 // jnp.dtype(dtype).itemsize)


def _tpu_limits():
    """Best-effort (vmem_cap_bytes, num_tensorcores) for the local chip."""
    vmem_cap = 64 * _MIB
    num_cores = 1
    try:
        info = pltpu.get_tpu_info()
        cap = getattr(info, "vmem_capacity_bytes", None)
        if cap:
            vmem_cap = int(cap)
    except Exception:
        pass
    try:
        kind = jax.devices()[0].device_kind.lower()
        if "v7" in kind or "7x" in kind:     # 2 TCs/chip, 64 MiB VMEM per TC
            num_cores = 2
            vmem_cap = min(vmem_cap, 64 * _MIB)
    except Exception:
        pass
    return min(vmem_cap, 64 * _MIB), num_cores


def _vmem_per_step(tn, d, dp, isz, wbuf):
    io = 2 * 2 * tn * d * isz          # x + out tiles, double-buffered
    w = wbuf * 2 * d * dp * isz        # W1^T + W2^T tiles
    b = 2 * 2 * (dp + d) * isz         # biases (tiny)
    inter = 2 * tn * dp * 4            # f32 intermediates (h, relu(h))
    return io + w + b + inter


def _largest_divisor_tile(n, sublanes, max_rows):
    """Largest multiple-of-`sublanes` divisor of n that is <= max_rows."""
    if n <= sublanes or n % sublanes != 0:
        return n if n <= max_rows else None
    best = None
    t = sublanes
    limit = min(n, max_rows)
    while t <= limit:
        if n % t == 0:
            best = t
        t += sublanes
    return best


# --------------------------------------------------------------------------
# Fused forward over all hierarchy levels in one pallas_call.
# --------------------------------------------------------------------------
@functools.partial(jax.jit, static_argnames=("row_tile",))
def project_net_fused(x_stack, w1t, b1, w2t, b2, *, row_tile=None):
    """relu(x @ w1t + b1) @ w2t + b2 for every level, one kernel.

    x_stack: [L, N, D]
    w1t:     [L, D, Dp]   (torch W1.T, hidden dim possibly lane-padded)
    b1:      [L, 1, Dp]
    w2t:     [L, Dp, D]
    b2:      [L, 1, D]
    """
    lvl, n, d = x_stack.shape
    dp = w1t.shape[-1]
    isz = jnp.dtype(x_stack.dtype).itemsize
    sublanes = _sublanes_for(x_stack.dtype)

    vmem_cap, num_cores = _tpu_limits()
    budget = int(0.6 * vmem_cap)

    # Single-buffer level-resident weights when they would dominate VMEM.
    wbuf = 1 if 2 * 2 * d * dp * isz > _WEIGHT_SINGLE_BUF_BYTES else 2

    row_first = False
    if row_tile is None:
        fixed = wbuf * 2 * d * dp * isz + 4 * (dp + d) * isz
        per_row = 4 * d * isz + 2 * dp * 4
        max_rows = max(sublanes, min(_MAX_ROW_TILE,
                                     (budget - fixed) // max(per_row, 1)))
        tn = _largest_divisor_tile(n, sublanes, max_rows)
        if tn is None:
            # TODO(synk): N that neither divides by the sublane count nor fits
            # the VMEM budget as one block falls back to a full-N block.
            tn = n
        # Megacore: on multi-TC chips, if the level axis does not split evenly,
        # make the row axis the leading (sharded) axis and split it evenly.
        if num_cores >= 2 and lvl % num_cores != 0 and n % sublanes == 0:
            if (n // tn) % num_cores == 0 and (n // tn) >= num_cores:
                row_first = True
            else:
                cap = min(max_rows, max(sublanes, n // num_cores))
                t2 = _largest_divisor_tile(n, sublanes, cap)
                if t2 is not None and (n // t2) % num_cores == 0:
                    tn, row_first = t2, True
    else:
        tn = row_tile

    assert n % tn == 0, f"row_tile {tn} must divide N={n}"
    assert tn % sublanes == 0 or tn == n, (
        f"row_tile {tn} must be a multiple of {sublanes} (or equal N={n})")
    gr = n // tn

    if row_first:
        grid = (gr, lvl)
        x_map = lambda i, l: (l, i, 0)
        w_map = lambda i, l: (l, 0, 0)
    else:
        grid = (lvl, gr)
        x_map = lambda l, i: (l, i, 0)
        w_map = lambda l, i: (l, 0, 0)

    wkw = {} if wbuf == 2 else {"pipeline_mode": pl.Buffered(1)}
    in_specs = [
        pl.BlockSpec((pl.Squeezed(), tn, d), x_map),            # x
        pl.BlockSpec((pl.Squeezed(), d, dp), w_map, **wkw),     # W1^T
        pl.BlockSpec((pl.Squeezed(), 1, dp), w_map),            # b1
        pl.BlockSpec((pl.Squeezed(), dp, d), w_map, **wkw),     # W2^T
        pl.BlockSpec((pl.Squeezed(), 1, d), w_map),             # b2
    ]
    out_spec = pl.BlockSpec((pl.Squeezed(), tn, d), x_map)

    working = _vmem_per_step(tn, d, dp, isz, wbuf)
    vmem_limit = int(min(vmem_cap, max(32 * _MIB, working + 8 * _MIB)))

    cost = pl.CostEstimate(
        flops=4 * lvl * n * d * dp,
        transcendentals=0,
        bytes_accessed=(2 * lvl * n * d + 2 * lvl * d * dp
                        + lvl * (dp + d)) * isz,
    )

    return pl.pallas_call(
        _proj_mlp_kernel,
        out_shape=jax.ShapeDtypeStruct((lvl, n, d), x_stack.dtype),
        grid=grid,
        in_specs=in_specs,
        out_specs=out_spec,
        compiler_params=pltpu.CompilerParams(
            dimension_semantics=("parallel", "parallel"),
            vmem_limit_bytes=vmem_limit),
        cost_estimate=cost,
    )(x_stack, w1t, b1, w2t, b2)


# --------------------------------------------------------------------------
# Parameter construction / packing (packing happens ONCE, not per forward).
# --------------------------------------------------------------------------
def init_student_projectnet_params(key, h_level, rep_dim, dtype=jnp.float32):
    """Per-level dicts with torch-layout weights ([out,in]) / biases ([out])."""
    params = []
    bound = 1.0 / float(rep_dim) ** 0.5
    for l in range(h_level):
        k = jax.random.fold_in(key, l)
        k1, k2, k3, k4 = jax.random.split(k, 4)
        params.append({
            "w1": jax.random.uniform(k1, (rep_dim, rep_dim), dtype, -bound, bound),
            "b1": jax.random.uniform(k2, (rep_dim,), dtype, -bound, bound),
            "w2": jax.random.uniform(k3, (rep_dim, rep_dim), dtype, -bound, bound),
            "b2": jax.random.uniform(k4, (rep_dim,), dtype, -bound, bound),
        })
    return params


def pack_params(params):
    """Stack per-level params to [L,...], transpose weights to [in,out], and
    zero-pad ONLY the hidden dim to the 128-lane width when the padding ratio
    is small (<= 1.25).  Padding is exact: relu(x@0+0)=0 and zero rows of W2^T
    contribute nothing.  Do this once at model-build time."""
    d = params[0]["w1"].shape[0]
    dp = d
    if d % _LANES != 0:
        cand = ((d + _LANES - 1) // _LANES) * _LANES
        if cand <= 1.25 * d:
            dp = cand
    pad = dp - d
    w1t = jnp.stack([p["w1"].T for p in params])            # [L, d, d]
    w2t = jnp.stack([p["w2"].T for p in params])            # [L, d, d]
    b1 = jnp.stack([p["b1"][None, :] for p in params])      # [L, 1, d]
    b2 = jnp.stack([p["b2"][None, :] for p in params])      # [L, 1, d]
    if pad:
        w1t = jnp.pad(w1t, ((0, 0), (0, 0), (0, pad)))       # [L, d, dp]
        b1 = jnp.pad(b1, ((0, 0), (0, 0), (0, pad)))         # [L, 1, dp]
        w2t = jnp.pad(w2t, ((0, 0), (0, pad), (0, 0)))       # [L, dp, d]
    return {"w1t": w1t, "b1": b1, "w2t": w2t, "b2": b2}


def student_projectnet_forward(x_list, packed, *, row_tile=None):
    """x_list: list of [N, D] arrays (one per level); packed: pack_params()."""
    shapes = {tuple(x.shape) for x in x_list}
    if len(shapes) == 1:
        x_stack = jnp.stack(x_list)                           # [L, N, D]
        out = project_net_fused(x_stack, packed["w1t"], packed["b1"],
                                packed["w2t"], packed["b2"], row_tile=row_tile)
        return [out[l] for l in range(len(x_list))]
    # TODO(synk): ragged levels (different N per level) fall back to one fused
    # call per level (L=1) instead of padding rows to a common N.
    return [
        project_net_fused(x[None], packed["w1t"][l:l + 1], packed["b1"][l:l + 1],
                          packed["w2t"][l:l + 1], packed["b2"][l:l + 1],
                          row_tile=row_tile)[0]
        for l, x in enumerate(x_list)
    ]


# --------------------------------------------------------------------------
# Pure-JAX reference (matches the PyTorch module).
# --------------------------------------------------------------------------
def _reference_forward(x_list, params):
    out = []
    for x, p in zip(x_list, params):
        h = jnp.maximum(x @ p["w1"].T + p["b1"], 0.0)
        out.append(h @ p["w2"].T + p["b2"])
    return out


if __name__ == "__main__":
    H_LEVEL = 3      # number of hierarchy levels
    N = 8            # nodes per level
    REP_DIM = 32     # cf.n_hidden

    key = jax.random.PRNGKey(0)
    k_params, k_x = jax.random.split(key)

    params = init_student_projectnet_params(k_params, H_LEVEL, REP_DIM)
    packed = pack_params(params)     # stacked / transposed once, not per call
    x_list = [
        jax.random.normal(jax.random.fold_in(k_x, l), (N, REP_DIM), jnp.float32)
        for l in range(H_LEVEL)
    ]

    out_list = student_projectnet_forward(x_list, packed)
    out_list = [jax.block_until_ready(o) for o in out_list]

    ref_list = _reference_forward(x_list, params)
    for o, r in zip(out_list, ref_list):
        assert o.shape == (N, REP_DIM)
        assert jnp.allclose(o, r, atol=1e-5, rtol=1e-5)

    print("KERNEL_OK")
</pallas_src>

<mosaic_0001>
module attributes {stable_mosaic.version = 11 : i64} {
  func.func @_proj_mlp_kernel(%arg0: i32, %arg1: i32, %arg2: memref<1x8x32xf32, #tpu.memory_space<vmem>>, %arg3: memref<1x32x32xf32, #tpu.memory_space<vmem>>, %arg4: memref<1x1x32xf32, #tpu.memory_space<vmem>>, %arg5: memref<1x32x32xf32, #tpu.memory_space<vmem>>, %arg6: memref<1x1x32xf32, #tpu.memory_space<vmem>>, %arg7: memref<1x8x32xf32, #tpu.memory_space<vmem>>) attributes {dimension_semantics = [#tpu.dimension_semantics<parallel>, #tpu.dimension_semantics<parallel>], iteration_bounds = array<i64: 3, 1>, scalar_prefetch = 0 : i64, scratch_operands = 0 : i64, tpu.core_type = #tpu.core_type<tc>, window_params = [{transform_indices = @transform_0, window_bounds = array<i64: 1, 8, 32>}, {transform_indices = @transform_1, window_bounds = array<i64: 1, 32, 32>}, {transform_indices = @transform_2, window_bounds = array<i64: 1, 1, 32>}, {transform_indices = @transform_3, window_bounds = array<i64: 1, 32, 32>}, {transform_indices = @transform_4, window_bounds = array<i64: 1, 1, 32>}, {transform_indices = @transform_5, window_bounds = array<i64: 1, 8, 32>}]} {
    %c0 = arith.constant 0 : index
    %c0_0 = arith.constant 0 : index
    %c0_1 = arith.constant 0 : index
    %0 = vector.load %arg2[%c0, %c0_0, %c0_1] : memref<1x8x32xf32, #tpu.memory_space<vmem>>, vector<1x8x32xf32>
    %1 = vector.shape_cast %0 : vector<1x8x32xf32> to vector<8x32xf32>
    %c0_2 = arith.constant 0 : index
    %c0_3 = arith.constant 0 : index
    %c0_4 = arith.constant 0 : index
    %2 = vector.load %arg3[%c0_2, %c0_3, %c0_4] : memref<1x32x32xf32, #tpu.memory_space<vmem>>, vector<1x32x32xf32>
    %3 = vector.shape_cast %2 : vector<1x32x32xf32> to vector<32x32xf32>
    %cst = arith.constant dense<0.000000e+00> : vector<8x32xf32>
    %4 = tpu.matmul %1, %3, %cst {dimension_numbers = #tpu.dot_dimension_numbers<[1], [0], [0], [1], [0, 0, 1, 1], [], []>} : vector<8x32xf32>, vector<32x32xf32>, vector<8x32xf32> -> vector<8x32xf32>
    %c0_5 = arith.constant 0 : index
    %c0_6 = arith.constant 0 : index
    %c0_7 = arith.constant 0 : index
    %5 = vector.load %arg4[%c0_5, %c0_6, %c0_7] : memref<1x1x32xf32, #tpu.memory_space<vmem>>, vector<1x1x32xf32>
    %6 = vector.shape_cast %5 : vector<1x1x32xf32> to vector<1x32xf32>
    %7 = vector.broadcast %6 : vector<1x32xf32> to vector<8x32xf32>
    %8 = arith.addf %4, %7 : vector<8x32xf32>
    %cst_8 = arith.constant 0.000000e+00 : f32
    %9 = vector.broadcast %cst_8 : f32 to vector<8x32xf32>
    %10 = arith.maximumf %8, %9 : vector<8x32xf32>
    %c0_9 = arith.constant 0 : index
    %c0_10 = arith.constant 0 : index
    %c0_11 = arith.constant 0 : index
    %11 = vector.load %arg5[%c0_9, %c0_10, %c0_11] : memref<1x32x32xf32, #tpu.memory_space<vmem>>, vector<1x32x32xf32>
    %12 = vector.shape_cast %11 : vector<1x32x32xf32> to vector<32x32xf32>
    %cst_12 = arith.constant dense<0.000000e+00> : vector<8x32xf32>
    %13 = tpu.matmul %10, %12, %cst_12 {dimension_numbers = #tpu.dot_dimension_numbers<[1], [0], [0], [1], [0, 0, 1, 1], [], []>} : vector<8x32xf32>, vector<32x32xf32>, vector<8x32xf32> -> vector<8x32xf32>
    %c0_13 = arith.constant 0 : index
    %c0_14 = arith.constant 0 : index
    %c0_15 = arith.constant 0 : index
    %14 = vector.load %arg6[%c0_13, %c0_14, %c0_15] : memref<1x1x32xf32, #tpu.memory_space<vmem>>, vector<1x1x32xf32>
    %15 = vector.shape_cast %14 : vector<1x1x32xf32> to vector<1x32xf32>
    %16 = vector.broadcast %15 : vector<1x32xf32> to vector<8x32xf32>
    %17 = arith.addf %13, %16 : vector<8x32xf32>
    %c0_16 = arith.constant 0 : index
    %c0_17 = arith.constant 0 : index
    %c0_18 = arith.constant 0 : index
    %18 = vector.load %arg7[%c0_16, %c0_17, %c0_18] : memref<1x8x32xf32, #tpu.memory_space<vmem>>, vector<1x8x32xf32>
    %19 = vector.shape_cast %18 : vector<1x8x32xf32> to vector<8x32xf32>
    %20 = vector.shape_cast %17 : vector<8x32xf32> to vector<1x8x32xf32>
    tpu.vector_store %arg7[%c0_16, %c0_17, %c0_18], %20 {strides = array<i32>} : memref<1x8x32xf32, #tpu.memory_space<vmem>>, vector<1x8x32xf32>,
    return
  }
  func.func @transform_0(%arg0: i32, %arg1: i32) -> (i32, i32, i32) {
    %c0_i32 = arith.constant 0 : i32
    %c0_i32_0 = arith.constant 0 : i32
    return %arg0, %arg1, %c0_i32 : i32, i32, i32
  }
  func.func @transform_1(%arg0: i32, %arg1: i32) -> (i32, i32, i32) {
    %c0_i32 = arith.constant 0 : i32
    %c0_i32_0 = arith.constant 0 : i32
    %c0_i32_1 = arith.constant 0 : i32
    return %arg0, %c0_i32, %c0_i32_0 : i32, i32, i32
  }
  func.func @transform_2(%arg0: i32, %arg1: i32) -> (i32, i32, i32) {
    %c0_i32 = arith.constant 0 : i32
    %c0_i32_0 = arith.constant 0 : i32
    %c0_i32_1 = arith.constant 0 : i32
    return %arg0, %c0_i32, %c0_i32_0 : i32, i32, i32
  }
  func.func @transform_3(%arg0: i32, %arg1: i32) -> (i32, i32, i32) {
    %c0_i32 = arith.constant 0 : i32
    %c0_i32_0 = arith.constant 0 : i32
    %c0_i32_1 = arith.constant 0 : i32
    return %arg0, %c0_i32, %c0_i32_0 : i32, i32, i32
  }
  func.func @transform_4(%arg0: i32, %arg1: i32) -> (i32, i32, i32) {
    %c0_i32 = arith.constant 0 : i32
    %c0_i32_0 = arith.constant 0 : i32
    %c0_i32_1 = arith.constant 0 : i32
    return %arg0, %c0_i32, %c0_i32_0 : i32, i32, i32
  }
  func.func @transform_5(%arg0: i32, %arg1: i32) -> (i32, i32, i32) {
    %c0_i32 = arith.constant 0 : i32
    %c0_i32_0 = arith.constant 0 : i32
    return %arg0, %arg1, %c0_i32 : i32, i32, i32
  }
}

</mosaic_0001>

<llo_original>
// kernel: project_net_fused.1
$region0: #{project_net_fused.1}
  #allocation0 [shape = 'u32[]', space=smem, size = 0x4, offset = 0x4, fixed_abs, tag = 'smem constant byte address 0x4 - core index']
  #allocation1 [shape = 'u32[144,128]{1,0:T(1,128)}', space=vmem, size = 0x12000, scoped, tag = 'internal scratch']
  %s0 = inlined_call_operand.hbm [shape: f32[3,8,32], index: 0, kind: input, shape index: {}]
  %s1 = inlined_call_operand.hbm [shape: f32[3,32,32], index: 1, kind: input, shape index: {}]
  %s2 = inlined_call_operand.vmem [shape: f32[3,1,32], index: 2, kind: input, shape index: {}]
  %s3 = inlined_call_operand.hbm [shape: f32[3,32,32], index: 3, kind: input, shape index: {}]
  %s4 = inlined_call_operand.vmem [shape: f32[3,1,32], index: 4, kind: input, shape index: {}]
  %s5 = inlined_call_operand.hbm [shape: f32[3,8,32], index: 5, kind: output, shape index: {}]
  %s6 = sld [smem:[#allocation0]]
  $region65: #{project_net_fused.1} parent=0
    _
  %s8 = ssub.s32 1, %s6
  %s9 = scalar_select 0, %s8, %s6
  $region1: #{project_net_fused.1} parent=0
    #allocation2 [shape = 'u8[8192]{0}', space=vmem, size = 0x2000, scoped, tag = 'input window, operand 0']
    #allocation3 [shape = 's32[2]{0}', space=sflag, size = 0x8, scoped, tag = 'scoped memory for project_net_fused.1']
    #allocation4 [shape = 's32[2]{0}', space=sflag, size = 0x8, scoped, tag = 'scoped memory for project_net_fused.1']
    #allocation5 [shape = 'u8[32768]{0}', space=vmem, size = 0x8000, scoped, tag = 'input window, operand 1']
    #allocation6 [shape = 's32[2]{0}', space=sflag, size = 0x8, scoped, tag = 'scoped memory for project_net_fused.1']
    #allocation7 [shape = 'u8[32768]{0}', space=vmem, size = 0x8000, scoped, tag = 'input window, operand 3']
    #allocation8 [shape = 'u8[8192]{0}', space=vmem, size = 0x2000, scoped, tag = 'output window, operand 0']
    %10 = vsyncpa [#allocation3], 0
    %s11 = scalar_lea.sflag [#allocation3], 1
    %12 = vsyncpa %s11, 0
    %13 = vsyncpa [#allocation6], 0
    %s14 = scalar_lea.sflag [#allocation6], 1
    %15 = vsyncpa %s14, 0
    %16 = vsyncpa [#allocation4], 0
    %s17 = scalar_lea.sflag [#allocation4], 1
    %18 = vsyncpa %s17, 0
    loop: start=0, step=1, limit=5
    $region2: #{project_net_fused.1} parent=1 // loop_pre_header
      _
    $region3: #{project_net_fused.1} parent=1 // loop_header
      %s20 = sphi 0, %s24
      %p21 = scmp.ge.s32.totalorder %s20, 5
      %s27 = sphi 0, %s39
      %s28 = sphi 0, %s35
      %s29 = sphi 0, %s27
      %s30 = sphi 0, %s28
      %s31 = sphi 0, %s29
      %s32 = sphi 0, %s30
      %s44 = sphi 0, %s46
      %s47 = sphi 0, %s44
      %s48 = sphi 0, %s47
      %s64 = sphi 0, %s48
      %s70 = sphi 0, %s72
      %s73 = sphi 0, %s70
      %s74 = sphi 0, %s73
      %s90 = sphi 0, %s74
      %s96 = sphi 0, %s98
      %s99 = sphi 0, %s96
      %s100 = sphi 0, %s99
      %s116 = sphi 0, %s100
      %s122 = sphi 0, %s124
      %s125 = sphi 0, %s122
      %s126 = sphi 0, %s125
      %s142 = sphi 0, %s126
      %s148 = sphi 0, %s150
      %s151 = sphi 0, %s148
      %s152 = sphi 0, %s151
      %s168 = sphi 0, %s152
      %s176 = sphi 0, %s178
      %s179 = sphi 0, %s176
      %s180 = sphi 0, %s179
      %s196 = sphi 0, %s180
    $region4: #{project_net_fused.1} parent=1 // loop_header_branch
      %23 = sbr.rel (%p21) target = $region8
    $region5: #{project_net_fused.1} parent=1 // loop_body
      %s25 = ssub.s32 %s20, 1
      %s26 = ssub.s32 %s20, 2
      %s33 = sadd.s32 1, %s28
      %p34 = scmp.ge.s32.totalorder %s33, 1
      %s35 = scalar_select %p34, 0, %s33
      %s36 = sadd.s32 1, %s27
      %s37 = scalar_select %p34, %s36, %s27
      %p38 = scmp.ge.s32.totalorder %s37, 3
      %s39 = scalar_select %p38, 0, %s37
      %s40 = ssub.s32 %s27, %s39
      %s41 = ssub.s32 %s28, %s35
      %s42 = sor.u32 %s40, %s41
      %p43 = scmp.eq.s32.totalorder %s42, 0
      %s45 = sadd.s32 %s44, 1
      %s46 = scalar_select %p43, %s44, %s45
      %p49 = pneg %p43
      %p50 = scmp.eq.s32.totalorder %s20, 2
      %p51 = por %p49, %p50
      %p52 = scmp.ne.s32.totalorder %s44, %s47
      %p53 = scmp.eq.s32.totalorder %s20, 0
      %p54 = por %p52, %p53
      %p55 = scmp.ne.s32.totalorder %s44, %s47
      %p56 = scmp.eq.s32.totalorder %s25, 2
      %p57 = por %p55, %p56
      %p58 = scmp.ne.s32.totalorder %s47, %s48
      %p59 = scmp.eq.s32.totalorder %s25, 0
      %p60 = por %p58, %p59
      %p61 = scmp.ne.s32.totalorder %s47, %s48
      %p62 = scmp.eq.s32.totalorder %s26, 2
      %p63 = por %p61, %p62
      %p65 = scmp.ne.s32.totalorder %s48, %s64
      %p66 = scmp.eq.s32.totalorder %s26, 0
      %p67 = por %p65, %p66
      %s68 = ssub.s32 %s27, %s39
      %p69 = scmp.eq.s32.totalorder %s68, 0
      %s71 = sadd.s32 %s70, 1
      %s72 = scalar_select %p69, %s70, %s71
      %p75 = pneg %p69
      %p76 = scmp.eq.s32.totalorder %s20, 2
      %p77 = por %p75, %p76
      %p78 = scmp.ne.s32.totalorder %s70, %s73
      %p79 = scmp.eq.s32.totalorder %s20, 0
      %p80 = por %p78, %p79
      %p81 = scmp.ne.s32.totalorder %s70, %s73
      %p82 = scmp.eq.s32.totalorder %s25, 2
      %p83 = por %p81, %p82
      %p84 = scmp.ne.s32.totalorder %s73, %s74
      %p85 = scmp.eq.s32.totalorder %s25, 0
      %p86 = por %p84, %p85
      %p87 = scmp.ne.s32.totalorder %s73, %s74
      %p88 = scmp.eq.s32.totalorder %s26, 2
      %p89 = por %p87, %p88
      %p91 = scmp.ne.s32.totalorder %s74, %s90
      %p92 = scmp.eq.s32.totalorder %s26, 0
      %p93 = por %p91, %p92
      %s94 = ssub.s32 %s27, %s39
      %p95 = scmp.eq.s32.totalorder %s94, 0
      %s97 = sadd.s32 %s96, 1
      %s98 = scalar_select %p95, %s96, %s97
      %p101 = pneg %p95
      %p102 = scmp.eq.s32.totalorder %s20, 2
      %p103 = por %p101, %p102
      %p104 = scmp.ne.s32.totalorder %s96, %s99
      %p105 = scmp.eq.s32.totalorder %s20, 0
      %p106 = por %p104, %p105
      %p107 = scmp.ne.s32.totalorder %s96, %s99
      %p108 = scmp.eq.s32.totalorder %s25, 2
      %p109 = por %p107, %p108
      %p110 = scmp.ne.s32.totalorder %s99, %s100
      %p111 = scmp.eq.s32.totalorder %s25, 0
      %p112 = por %p110, %p111
      %p113 = scmp.ne.s32.totalorder %s99, %s100
      %p114 = scmp.eq.s32.totalorder %s26, 2
      %p115 = por %p113, %p114
      %p117 = scmp.ne.s32.totalorder %s100, %s116
      %p118 = scmp.eq.s32.totalorder %s26, 0
      %p119 = por %p117, %p118
      %s120 = ssub.s32 %s27, %s39
      %p121 = scmp.eq.s32.totalorder %s120, 0
      %s123 = sadd.s32 %s122, 1
      %s124 = scalar_select %p121, %s122, %s123
      %p127 = pneg %p121
      %p128 = scmp.eq.s32.totalorder %s20, 2
      %p129 = por %p127, %p128
      %p130 = scmp.ne.s32.totalorder %s122, %s125
      %p131 = scmp.eq.s32.totalorder %s20, 0
      %p132 = por %p130, %p131
      %p133 = scmp.ne.s32.totalorder %s122, %s125
      %p134 = scmp.eq.s32.totalorder %s25, 2
      %p135 = por %p133, %p134
      %p136 = scmp.ne.s32.totalorder %s125, %s126
      %p137 = scmp.eq.s32.totalorder %s25, 0
      %p138 = por %p136, %p137
      %p139 = scmp.ne.s32.totalorder %s125, %s126
      %p140 = scmp.eq.s32.totalorder %s26, 2
      %p141 = por %p139, %p140
      %p143 = scmp.ne.s32.totalorder %s126, %s142
      %p144 = scmp.eq.s32.totalorder %s26, 0
      %p145 = por %p143, %p144
      %s146 = ssub.s32 %s27, %s39
      %p147 = scmp.eq.s32.totalorder %s146, 0
      %s149 = sadd.s32 %s148, 1
      %s150 = scalar_select %p147, %s148, %s149
      %p153 = pneg %p147
      %p154 = scmp.eq.s32.totalorder %s20, 2
      %p155 = por %p153, %p154
      %p156 = scmp.ne.s32.totalorder %s148, %s151
      %p157 = scmp.eq.s32.totalorder %s20, 0
      %p158 = por %p156, %p157
      %p159 = scmp.ne.s32.totalorder %s148, %s151
      %p160 = scmp.eq.s32.totalorder %s25, 2
      %p161 = por %p159, %p160
      %p162 = scmp.ne.s32.totalorder %s151, %s152
      %p163 = scmp.eq.s32.totalorder %s25, 0
      %p164 = por %p162, %p163
      %p165 = scmp.ne.s32.totalorder %s151, %s152
      %p166 = scmp.eq.s32.totalorder %s26, 2
      %p167 = por %p165, %p166
      %p169 = scmp.ne.s32.totalorder %s152, %s168
      %p170 = scmp.eq.s32.totalorder %s26, 0
      %p171 = por %p169, %p170
      %s172 = ssub.s32 %s27, %s39
      %s173 = ssub.s32 %s28, %s35
      %s174 = sor.u32 %s172, %s173
      %p175 = scmp.eq.s32.totalorder %s174, 0
      %s177 = sadd.s32 %s176, 1
      %s178 = scalar_select %p175, %s176, %s177
      %p181 = pneg %p175
      %p182 = scmp.eq.s32.totalorder %s20, 2
      %p183 = por %p181, %p182
      %p184 = scmp.ne.s32.totalorder %s176, %s179
      %p185 = scmp.eq.s32.totalorder %s20, 0
      %p186 = por %p184, %p185
      %p187 = scmp.ne.s32.totalorder %s176, %s179
      %p188 = scmp.eq.s32.totalorder %s25, 2
      %p189 = por %p187, %p188
      %p190 = scmp.ne.s32.totalorder %s179, %s180
      %p191 = scmp.eq.s32.totalorder %s25, 0
      %p192 = por %p190, %p191
      %p193 = scmp.ne.s32.totalorder %s179, %s180
      %p194 = scmp.eq.s32.totalorder %s26, 2
      %p195 = por %p193, %p194
      %p197 = scmp.ne.s32.totalorder %s180, %s196
      %p198 = scmp.eq.s32.totalorder %s26, 0
      %p199 = por %p197, %p198
      %p200 = scmp.le.s32.totalorder 1, %s20
      %p201 = scmp.lt.s32.totalorder %s20, 4
      %p202 = pnand %p200, %p201
      %p203 = pneg %p202
      // Predicated region
      $region9: #{project_net_fused.1} parent=5 // pred_check
        _
      $region10: #{project_net_fused.1} parent=5 // pred_check_branch
        %205 = sbr.rel (%p202) target = $region12
      $region11: #{project_net_fused.1} parent=5 // pred_region
        %s206 = ssub.s32 %s20, 1
      $region12: #{project_net_fused.1} parent=5 // pred_fallthru
        _
      %p207 = scmp.lt.s32.totalorder %s20, 3
      // Predicated region
      $region13: #{project_net_fused.1} parent=5 // pred_check
        %p208 = pneg %p207
      $region14: #{project_net_fused.1} parent=5 // pred_check_branch
        %210 = sbr.rel (%p208) target = $region16
      $region15: #{project_net_fused.1} parent=5 // pred_region
        // Predicated region
        $region17: #{project_net_fused.1} parent=15 // pred_check
          %p211 = pneg %p54
        $region18: #{project_net_fused.1} parent=15 // pred_check_branch
          %213 = sbr.rel (%p211) target = $region20
        $region19: #{project_net_fused.1} parent=15 // pred_region
          %s214 = sand.u32 %s44, 1
          %s215 = scalar_lea.sflag [#allocation3], %s214
          %s216 = sand.u32 %s44, 1
          %s217 = smul.addr %s216, 8
          %s218 = scalar_lea.vmem [#allocation2], %s217
          %s220 = ssub.s32 128, 128
          %221 = vsyncadd %s215, %s220
          %s222 = sadd.s32 %s28, %s27
          %s223 = smul.addr %s222, 128
          %s224 = scalar_lea.hbm %s0, %s223
          %s226 = sshll.u32 %s218, 4
          %s227 = int_to_ptr.vmem [resolvable:$true] %s226
          %229 = dma.hbm_to_vmem [thread:$0]  %s224, 128, %s227, %s215
        $region20: #{project_net_fused.1} parent=15 // pred_fallthru
          _
        // Predicated region
        $region21: #{project_net_fused.1} parent=15 // pred_check
          %p230 = pneg %p80
        $region22: #{project_net_fused.1} parent=15 // pred_check_branch
          %232 = sbr.rel (%p230) target = $region24
        $region23: #{project_net_fused.1} parent=15 // pred_region
          %s233 = sand.u32 %s20, 1
          %s234 = scalar_lea.sflag [#allocation6], %s233
          %s235 = sand.u32 %s70, 1
          %s236 = smul.addr %s235, 32
          %s237 = scalar_lea.vmem [#allocation5], %s236
          %s239 = ssub.s32 512, 512
          %240 = vsyncadd %s234, %s239
          %s241 = smul.addr %s27, 4
          %s242 = smul.addr %s241, 128
          %s243 = scalar_lea.hbm %s1, %s242
          %s244 = sshll.u32 %s237, 4
          %s245 = int_to_ptr.vmem [resolvable:$true] %s244
          %250 = dma.hbm_to_vmem [thread:$0]  %s243, 512, %s245, %s234, 128, 128, 8
        $region24: #{project_net_fused.1} parent=15 // pred_fallthru
          _
        // Predicated region
        $region25: #{project_net_fused.1} parent=15 // pred_check
          %p251 = pneg %p106
        $region26: #{project_net_fused.1} parent=15 // pred_check_branch
          %253 = sbr.rel (%p251) target = $region28
        $region27: #{project_net_fused.1} parent=15 // pred_region
          %p254 = scmp.lt.s32.totalorder %s27, 2
          %s255 = scalar_select %p254, %s27, 2
          %s256 = scalar_lea.vmem %s2, %s255
        $region28: #{project_net_fused.1} parent=15 // pred_fallthru
          _
        // Predicated region
        $region29: #{project_net_fused.1} parent=15 // pred_check
          %p257 = pneg %p132
        $region30: #{project_net_fused.1} parent=15 // pred_check_branch
          %259 = sbr.rel (%p257) target = $region32
        $region31: #{project_net_fused.1} parent=15 // pred_region
          %s260 = sand.u32 %s20, 1
          %s261 = scalar_lea.sflag [#allocation6], %s260
          %s262 = sand.u32 %s122, 1
          %s263 = smul.addr %s262, 32
          %s264 = scalar_lea.vmem [#allocation7], %s263
          %s266 = ssub.s32 512, 512
          %267 = vsyncadd %s261, %s266
          %s268 = smul.addr %s27, 4
          %s269 = smul.addr %s268, 128
          %s270 = scalar_lea.hbm %s3, %s269
          %s271 = sshll.u32 %s264, 4
          %s272 = int_to_ptr.vmem [resolvable:$true] %s271
          %277 = dma.hbm_to_vmem [thread:$0]  %s270, 512, %s272, %s261, 128, 128, 8
        $region32: #{project_net_fused.1} parent=15 // pred_fallthru
          _
        // Predicated region
        $region33: #{project_net_fused.1} parent=15 // pred_check
          %p278 = pneg %p158
        $region34: #{project_net_fused.1} parent=15 // pred_check_branch
          %280 = sbr.rel (%p278) target = $region36
        $region35: #{project_net_fused.1} parent=15 // pred_region
          %p281 = scmp.lt.s32.totalorder %s27, 2
          %s282 = scalar_select %p281, %s27, 2
          %s283 = scalar_lea.vmem %s4, %s282
        $region36: #{project_net_fused.1} parent=15 // pred_fallthru
          _
      $region16: #{project_net_fused.1} parent=5 // pred_fallthru
        _
      %p284 = scmp.le.s32.totalorder 1, %s20
      %p285 = scmp.lt.s32.totalorder %s20, 4
      %p286 = pnand %p284, %p285
      %p287 = pneg %p286
      // Predicated region
      $region37: #{project_net_fused.1} parent=5 // pred_check
        _
      $region38: #{project_net_fused.1} parent=5 // pred_check_branch
        %289 = sbr.rel (%p286) target = $region40
      $region39: #{project_net_fused.1} parent=5 // pred_region
        %s290 = ssub.s32 %s20, 1
        %s291 = sand.u32 %s47, 1
        %s292 = scalar_lea.sflag [#allocation3], %s291
        %s293 = sand.u32 %s47, 1
        %s294 = smul.addr %s293, 8
        %s295 = scalar_lea.vmem [#allocation2], %s294
        // Predicated region
        $region41: #{project_net_fused.1} parent=39 // pred_check
          %p296 = pneg %p60
        $region42: #{project_net_fused.1} parent=39 // pred_check_branch
          %298 = sbr.rel (%p296) target = $region44
        $region43: #{project_net_fused.1} parent=39 // pred_region
          %299 = dma.done %s292, 128
        $region44: #{project_net_fused.1} parent=39 // pred_fallthru
          _
        %s300 = sand.u32 %s25, 1
        %s301 = scalar_lea.sflag [#allocation6], %s300
        %s302 = sand.u32 %s73, 1
        %s303 = smul.addr %s302, 32
        %s304 = scalar_lea.vmem [#allocation5], %s303
        // Predicated region
        $region45: #{project_net_fused.1} parent=39 // pred_check
          %p305 = pneg %p86
        $region46: #{project_net_fused.1} parent=39 // pred_check_branch
          %307 = sbr.rel (%p305) target = $region48
        $region47: #{project_net_fused.1} parent=39 // pred_region
          %308 = dma.done %s301, 512
        $region48: #{project_net_fused.1} parent=39 // pred_fallthru
          _
        %s309 = sand.u32 %s25, 1
        %s310 = scalar_lea.sflag [#allocation6], %s309
        %s311 = sand.u32 %s125, 1
        %s312 = smul.addr %s311, 32
        %s313 = scalar_lea.vmem [#allocation7], %s312
        // Predicated region
        $region49: #{project_net_fused.1} parent=39 // pred_check
          %p314 = pneg %p138
        $region50: #{project_net_fused.1} parent=39 // pred_check_branch
          %316 = sbr.rel (%p314) target = $region52
        $region51: #{project_net_fused.1} parent=39 // pred_region
          %317 = dma.done %s310, 512
        $region52: #{project_net_fused.1} parent=39 // pred_fallthru
          _
        %s318 = sand.u32 %s47, 1
        %s319 = scalar_lea.sflag [#allocation3], %s318
        %s320 = sand.u32 %s47, 1
        %s321 = smul.addr %s320, 8
        %s322 = scalar_lea.vmem [#allocation2], %s321
        %p323 = pneg %p60
        %p324 = pneg %p57
        %s325 = sand.u32 %s25, 1
        %s326 = scalar_lea.sflag [#allocation6], %s325
        %s327 = sand.u32 %s73, 1
        %s328 = smul.addr %s327, 32
        %s329 = scalar_lea.vmem [#allocation5], %s328
        %p330 = pneg %p86
        %p331 = pneg %p83
        %p332 = scmp.lt.s32.totalorder %s29, 2
        %s333 = scalar_select %p332, %s29, 2
        %s334 = scalar_lea.vmem %s2, %s333
        %p335 = pneg %p112
        %p336 = pneg %p109
        %s337 = sand.u32 %s25, 1
        %s338 = scalar_lea.sflag [#allocation6], %s337
        %s339 = sand.u32 %s125, 1
        %s340 = smul.addr %s339, 32
        %s341 = scalar_lea.vmem [#allocation7], %s340
        %p342 = pneg %p138
        %p343 = pneg %p135
        %p344 = scmp.lt.s32.totalorder %s29, 2
        %s345 = scalar_select %p344, %s29, 2
        %s346 = scalar_lea.vmem %s4, %s345
        %p347 = pneg %p164
        %p348 = pneg %p161
        %p349 = pneg %p192
        %p350 = pneg %p189
        %s351 = sand.u32 %s179, 1
        %s352 = scalar_lea.sflag [#allocation4], %s351
        %s353 = sand.u32 %s179, 1
        %s354 = smul.addr %s353, 8
        %s355 = scalar_lea.vmem [#allocation8], %s354
        %p356 = scmp.lt.s32.totalorder %s29, 2
        %s357 = scalar_select %p356, %s29, 2
        %s358 = scalar_lea.vmem %s2, %s357
        %p359 = scmp.lt.s32.totalorder %s29, 2
        %s360 = scalar_select %p359, %s29, 2
        %s361 = scalar_lea.vmem %s4, %s360
        %v362 = vld [vmem:[%s295] sm:$0xff]
        %v363 = vld [vmem:[%s304] sm:$0xff]
        %v364 = vld [vmem:[%s304 + $0x8] sm:$0xff]
        %v365 = vld [vmem:[%s304 + $0x10] sm:$0xff]
        %v366 = vld [vmem:[%s304 + $0x18] sm:$0xff]
        %v367 = vld [vmem:[%s358] sm:$0x1]
        %v369 = vlaneseq
        %v370 = vshrl.u32 %v369, 7
        %v371 = vsub.s32 0, %v370
        %v372 = vrot.slane %v367, %v371
        %vm374 = vcmask 261120
        %v376 = vsel %vm374, %v362, 0
        %378 = vmatprep.subr.mxu0 0.0
        %379 = vmatpush1.msra.mxu0 0.0
        %380 = vmatprep.subr.mxu0 0.0
        %381 = vmatpush1.msra.mxu0 0.0
        %382 = vmatprep.subr.mxu0 0.0
        %383 = vmatpush1.msra.mxu0 0.0
        %384 = vmatprep.subr.mxu0 0.0
        %385 = vmatpush1.msra.mxu0 0.0
        %386 = vmatprep.subr.mxu0 0.0
        %387 = vmatpush1.msra.mxu0 0.0
        %388 = vmatprep.subr.mxu0 0.0
        %389 = vmatpush1.msra.mxu0 0.0
        %390 = vmatprep.subr.mxu0 0.0
        %391 = vmatpush1.msra.mxu0 0.0
        %392 = vmatprep.subr.mxu0 0.0
        %393 = vmatpush1.msra.mxu0 0.0
        %394 = vmatprep.subr.mxu0 0.0
        %395 = vmatpush1.msra.mxu0 0.0
        %396 = vmatprep.subr.mxu0 0.0
        %397 = vmatpush1.msra.mxu0 0.0
        %398 = vmatprep.subr.mxu0 0.0
        %399 = vmatpush1.msra.mxu0 0.0
        %400 = vmatprep.subr.mxu0 0.0
        %401 = vmatpush1.msra.mxu0 0.0
        %402 = vmatprep.subr.mxu0 0.0
        %403 = vmatpush1.msra.mxu0 %v366
        %404 = vmatprep.subr.mxu0 0.0
        %405 = vmatpush1.msra.mxu0 %v365
        %406 = vmatprep.subr.mxu0 0.0
        %407 = vmatpush1.msra.mxu0 %v364
        %408 = vmatprep.subr.mxu0 0.0
        %409 = vmatpush1.msra.mxu0 %v363
        %410 = vmatprep.subr.mxu0 0.0
        %411 = vmatpush2.msra.mxu0 0.0
        %412 = vmatprep.subr.mxu0 0.0
        %413 = vmatpush2.msra.mxu0 0.0
        %414 = vmatprep.subr.mxu0 0.0
        %415 = vmatpush2.msra.mxu0 0.0
        %416 = vmatprep.subr.mxu0 0.0
        %417 = vmatpush2.msra.mxu0 0.0
        %418 = vmatprep.subr.mxu0 0.0
        %419 = vmatpush2.msra.mxu0 0.0
        %420 = vmatprep.subr.mxu0 0.0
        %421 = vmatpush2.msra.mxu0 0.0
        %422 = vmatprep.subr.mxu0 0.0
        %423 = vmatpush2.msra.mxu0 0.0
        %424 = vmatprep.subr.mxu0 0.0
        %425 = vmatpush2.msra.mxu0 0.0
        %426 = vmatprep.subr.mxu0 0.0
        %427 = vmatpush2.msra.mxu0 0.0
        %428 = vmatprep.subr.mxu0 0.0
        %429 = vmatpush2.msra.mxu0 0.0
        %430 = vmatprep.subr.mxu0 0.0
        %431 = vmatpush2.msra.mxu0 0.0
        %432 = vmatprep.subr.mxu0 0.0
        %433 = vmatpush2.msra.mxu0 0.0
        %434 = vmatprep.subr.mxu0 0.0
        %435 = vmatpush2.msra.mxu0 0.0
        %436 = vmatprep.subr.mxu0 0.0
        %437 = vmatpush2.msra.mxu0 0.0
        %438 = vmatprep.subr.mxu0 0.0
        %439 = vmatpush2.msra.mxu0 0.0
        %440 = vmatprep.subr.mxu0 0.0
        %441 = vmatpush2.msra.mxu0 0.0
        %442 = vmatprep.mubr.f32.mxu0 0.0
        %443 = vmatmul.mubr.f32.gmra.mxu0 %v376
        %v444 = vpop.f32.mrf.mxu0
        %v445 = vadd.f32 %v372, %v444
        %v446 = vpop.f32.mrf.mxu0
        %447 = vdwg.mxu0
        %v448 = vmax.f32 %v445, 0.0
        %v449 = vld [vmem:[%s313] sm:$0xff]
        %v450 = vld [vmem:[%s313 + $0x8] sm:$0xff]
        %v451 = vld [vmem:[%s313 + $0x10] sm:$0xff]
        %v452 = vld [vmem:[%s313 + $0x18] sm:$0xff]
        %v453 = vld [vmem:[%s361] sm:$0x1]
        %v455 = vlaneseq
        %v456 = vshrl.u32 %v455, 7
        %v457 = vsub.s32 0, %v456
        %v458 = vrot.slane %v453, %v457
        %v461 = vsel %vm374, %v448, 0
        %463 = vmatprep.subr.mxu0 0.0
        %464 = vmatpush1.msra.mxu0 0.0
        %465 = vmatprep.subr.mxu0 0.0
        %466 = vmatpush1.msra.mxu0 0.0
        %467 = vmatprep.subr.mxu0 0.0
        %468 = vmatpush1.msra.mxu0 0.0
        %469 = vmatprep.subr.mxu0 0.0
        %470 = vmatpush1.msra.mxu0 0.0
        %471 = vmatprep.subr.mxu0 0.0
        %472 = vmatpush1.msra.mxu0 0.0
        %473 = vmatprep.subr.mxu0 0.0
        %474 = vmatpush1.msra.mxu0 0.0
        %475 = vmatprep.subr.mxu0 0.0
        %476 = vmatpush1.msra.mxu0 0.0
        %477 = vmatprep.subr.mxu0 0.0
        %478 = vmatpush1.msra.mxu0 0.0
        %479 = vmatprep.subr.mxu0 0.0
        %480 = vmatpush1.msra.mxu0 0.0
        %481 = vmatprep.subr.mxu0 0.0
        %482 = vmatpush1.msra.mxu0 0.0
        %483 = vmatprep.subr.mxu0 0.0
        %484 = vmatpush1.msra.mxu0 0.0
        %485 = vmatprep.subr.mxu0 0.0
        %486 = vmatpush1.msra.mxu0 0.0
        %487 = vmatprep.subr.mxu0 0.0
        %488 = vmatpush1.msra.mxu0 %v452
        %489 = vmatprep.subr.mxu0 0.0
        %490 = vmatpush1.msra.mxu0 %v451
        %491 = vmatprep.subr.mxu0 0.0
        %492 = vmatpush1.msra.mxu0 %v450
        %493 = vmatprep.subr.mxu0 0.0
        %494 = vmatpush1.msra.mxu0 %v449
        %495 = vmatprep.subr.mxu0 0.0
        %496 = vmatpush2.msra.mxu0 0.0
        %497 = vmatprep.subr.mxu0 0.0
        %498 = vmatpush2.msra.mxu0 0.0
        %499 = vmatprep.subr.mxu0 0.0
        %500 = vmatpush2.msra.mxu0 0.0
        %501 = vmatprep.subr.mxu0 0.0
        %502 = vmatpush2.msra.mxu0 0.0
        %503 = vmatprep.subr.mxu0 0.0
        %504 = vmatpush2.msra.mxu0 0.0
        %505 = vmatprep.subr.mxu0 0.0
        %506 = vmatpush2.msra.mxu0 0.0
        %507 = vmatprep.subr.mxu0 0.0
        %508 = vmatpush2.msra.mxu0 0.0
        %509 = vmatprep.subr.mxu0 0.0
        %510 = vmatpush2.msra.mxu0 0.0
        %511 = vmatprep.subr.mxu0 0.0
        %512 = vmatpush2.msra.mxu0 0.0
        %513 = vmatprep.subr.mxu0 0.0
        %514 = vmatpush2.msra.mxu0 0.0
        %515 = vmatprep.subr.mxu0 0.0
        %516 = vmatpush2.msra.mxu0 0.0
        %517 = vmatprep.subr.mxu0 0.0
        %518 = vmatpush2.msra.mxu0 0.0
        %519 = vmatprep.subr.mxu0 0.0
        %520 = vmatpush2.msra.mxu0 0.0
        %521 = vmatprep.subr.mxu0 0.0
        %522 = vmatpush2.msra.mxu0 0.0
        %523 = vmatprep.subr.mxu0 0.0
        %524 = vmatpush2.msra.mxu0 0.0
        %525 = vmatprep.subr.mxu0 0.0
        %526 = vmatpush2.msra.mxu0 0.0
        %527 = vmatprep.mubr.f32.mxu0 0.0
        %528 = vmatmul.mubr.f32.gmra.mxu0 %v461
        %v529 = vpop.f32.mrf.mxu0
        %v530 = vadd.f32 %v458, %v529
        %v531 = vpop.f32.mrf.mxu0
        %532 = vdwg.mxu0
        %533 = vst.msk [vmem:[%s355] sm:$0xff] %vm374, %v530
        %s534 = sand.u32 %s179, 1
        %s535 = scalar_lea.sflag [#allocation4], %s534
        %s536 = sand.u32 %s179, 1
        %s537 = smul.addr %s536, 8
        %s538 = scalar_lea.vmem [#allocation8], %s537
        // Predicated region
        $region53: #{project_net_fused.1} parent=39 // pred_check
          %p539 = pneg %p189
        $region54: #{project_net_fused.1} parent=39 // pred_check_branch
          %541 = sbr.rel (%p539) target = $region56
        $region55: #{project_net_fused.1} parent=39 // pred_region
          %s543 = ssub.s32 128, 128
          %544 = vsyncadd %s535, %s543
          %s545 = sadd.s32 %s30, %s29
          %s546 = smul.addr %s545, 128
          %s547 = scalar_lea.hbm %s5, %s546
          %s549 = sshll.u32 %s538, 4
          %s550 = int_to_ptr.vmem [resolvable:$true] %s549
          %552 = dma.vmem_to_hbm [thread:$0]  %s550, 128, %s547, %s535
        $region56: #{project_net_fused.1} parent=39 // pred_fallthru
          _
      $region40: #{project_net_fused.1} parent=5 // pred_fallthru
        _
      %p553 = scmp.le.s32.totalorder 2, %s20
      // Predicated region
      $region57: #{project_net_fused.1} parent=5 // pred_check
        %p554 = pneg %p553
      $region58: #{project_net_fused.1} parent=5 // pred_check_branch
        %556 = sbr.rel (%p554) target = $region60
      $region59: #{project_net_fused.1} parent=5 // pred_region
        %s557 = ssub.s32 %s20, 2
        // Predicated region
        $region61: #{project_net_fused.1} parent=59 // pred_check
          %p558 = pneg %p195
        $region62: #{project_net_fused.1} parent=59 // pred_check_branch
          %560 = sbr.rel (%p558) target = $region64
        $region63: #{project_net_fused.1} parent=59 // pred_region
          %s561 = sand.u32 %s180, 1
          %s562 = scalar_lea.sflag [#allocation4], %s561
          %s563 = sand.u32 %s180, 1
          %s564 = smul.addr %s563, 8
          %s565 = scalar_lea.vmem [#allocation8], %s564
          %566 = dma.done %s562, 128
        $region64: #{project_net_fused.1} parent=59 // pred_fallthru
          _
      $region60: #{project_net_fused.1} parent=5 // pred_fallthru
        _
    $region6: #{project_net_fused.1} parent=1 // loop_footer
      %s24 = sadd.s32 1, %s20
    $region7: #{project_net_fused.1} parent=1 // loop_footer_branch
      %19 = sbr.rel target = $region3
    $region8: #{project_net_fused.1} parent=1 // loop_exit
      _
    %567 = vsyncpa [#allocation3], 1
    %s568 = scalar_lea.sflag [#allocation3], 1
    %569 = vsyncpa %s568, 1
    %570 = vsyncpa [#allocation6], 1
    %s571 = scalar_lea.sflag [#allocation6], 1
    %572 = vsyncpa %s571, 1
    %573 = vsyncpa [#allocation4], 1
    %s574 = scalar_lea.sflag [#allocation4], 1
    %575 = vsyncpa %s574, 1

</llo_original>
